<compile_context>
chip_gen: v6e
topology: v6e:2x2x1
jax: 0.10.0
libtpu: 0.0.40
codegen_flags: <defaults>
</compile_context>

<pallas_src>
import functools

import jax
import jax.numpy as jnp
import numpy as np
from jax.experimental import pallas as pl
from jax.experimental.pallas import tpu as pltpu


# ------------------------------- kernel -------------------------------------

def pool_kernel(counts_ref, c_ref, a_ref, w2_ref, b2_ref, out_ref,
                *, tile_i, n_pad):
    """One grid step = one sequence `s`, one tile of `tile_i` self-peds.

    counts_ref: (num_seq,)      SMEM, valid pedestrian count per sequence
    c_ref     : (1, n_pad, M)   C[j] = posW[j]@W1a' + hid[j]@W1b' + const (f32)
    a_ref     : (1, tile_i, M)  A[i] = posW[i]@W1a'                       (f32)
    w2_ref    : (M, B)          BN-folded layer-2 weight (bf16, resident)
    b2_ref    : (1, B)          BN-folded layer-2 bias   (f32)
    out_ref   : (1, tile_i, B)  out[i] = 2 * max_j relu(relu(C[j]-A[i])@W2'+b2')
    """
    n_valid = counts_ref[pl.program_id(0)]            # scalar from SMEM
    c = c_ref[0]                                       # (n_pad, M)
    a = a_ref[0]                                       # (tile_i, M)
    w2 = w2_ref[...]                                   # (M, B) bf16
    b2 = b2_ref[...]                                   # (1, B)

    # Layer 1 (spatial embedding + Linear + folded BN) reduced to a broadcast
    # subtract + ReLU; all layer-1 matmul work was deduplicated to O(N) in the
    # wrapper.  Keep f32 for the elementwise path (no bf16 VALU on v5e).
    h1 = jnp.maximum(c[None, :, :] - a[:, None, :], 0.0)   # (tile_i, n_pad, M)
    h1 = h1.reshape(tile_i * n_pad, -1)                     # free view (n_pad%8==0)

    # Layer 2 (Linear 512->B + folded BN + ReLU): ONE fused MXU dot per step.
    h2 = jnp.dot(h1.astype(w2.dtype), w2,
                 preferred_element_type=jnp.float32) + b2   # (tile_i*n_pad, B)
    h2 = jnp.maximum(h2, 0.0)
    h2 = h2.reshape(tile_i, n_pad, -1)                      # (tile_i, n_pad, B)

    # Mask padded "other ped" rows out of the max.  Valid rows are >= 0 after
    # ReLU and there is always at least one valid row, so masking to 0 is
    # equivalent to masking to -inf.
    j_idx = jax.lax.broadcasted_iota(jnp.int32, (n_pad, h2.shape[-1]), 0)
    h2 = jnp.where((j_idx < n_valid)[None, :, :], h2, 0.0)

    # Max over the j (sublane) axis with B on lanes (XLU), x2 applied here
    # (repeat + view + add in the original module == 2x broadcast).
    out_ref[0] = 2.0 * jnp.max(h2, axis=1)                  # (tile_i, B) dense


# ------------------------------- wrapper ------------------------------------

def _round_up(x, m):
    return ((x + m - 1) // m) * m


def _pick_tile_i(n_pad, max_rows=2048):
    """Largest multiple-of-8 divisor of n_pad keeping tile_i*n_pad <= max_rows."""
    best = 8
    t = 8
    while t <= n_pad:
        if n_pad % t == 0 and t * n_pad <= max_rows:
            best = t
        t += 8
    return best


@functools.partial(jax.jit, static_argnames=("seq_start_end",))
def pool_hidden_net_forward(h_states, end_pos, params, *, seq_start_end):
    """JAX/Pallas equivalent of PoolHiddenNet.forward.

    h_states     : (num_layers, batch, h_dim)
    end_pos      : (batch, 2)
    seq_start_end: static tuple of (start, end) tuples
    returns      : list of (num_ped, num_ped, bottleneck_dim) arrays
    """
    H = params["w1bF"].shape[0]
    M = params["w1aF"].shape[1]
    B = params["w2F"].shape[1]
    h_flat = h_states.reshape(-1, H)

    ns = [int(e) - int(s) for (s, e) in seq_start_end]
    num_seq = len(seq_start_end)
    n_pad = max(8, _round_up(max(ns), 8))
    tile_i = _pick_tile_i(n_pad)

    # Per-pedestrian (O(N)) projections — dedup of the old (N*N, .) hid_rep /
    # rel-embedding matmuls.  NOTE: distributing (pos[j]-pos[i])@Ws@W1a as
    # posW[j]@W1a - posW[i]@W1a can lose a little precision for large nearly
    # equal coordinates; acceptable at the kernel's bf16-MXU tolerance.
    c_list, a_list = [], []
    for (start, end), n in zip(seq_start_end, ns):
        hid = h_flat[start:end]                        # (n, H)
        pos = end_pos[start:end]                       # (n, 2)
        posw = pos @ params["ws"]                      # (n, E)
        a = posw @ params["w1aF"]                      # (n, M)
        c = a + hid @ params["w1bF"] + params["cbias"]  # (n, M)
        pad = n_pad - n
        a_list.append(jnp.pad(a, ((0, pad), (0, 0))))
        c_list.append(jnp.pad(c, ((0, pad), (0, 0))))
    c_all = jnp.stack(c_list)                          # (num_seq, n_pad, M)
    a_all = jnp.stack(a_list)                          # (num_seq, n_pad, M)
    counts = jnp.asarray(ns, dtype=jnp.int32)          # (num_seq,)

    out = pl.pallas_call(
        functools.partial(pool_kernel, tile_i=tile_i, n_pad=n_pad),
        out_shape=jax.ShapeDtypeStruct((num_seq, n_pad, B), jnp.float32),
        grid_spec=pltpu.PrefetchScalarGridSpec(
            num_scalar_prefetch=1,
            grid=(num_seq, n_pad // tile_i),
            in_specs=[
                # C for the current sequence (constant across the tile axis).
                pl.BlockSpec((1, n_pad, M), lambda s, t, cnt: (s, 0, 0)),
                # A rows for the current self-ped tile.
                pl.BlockSpec((1, tile_i, M), lambda s, t, cnt: (s, t, 0)),
                # BN-folded layer-2 weight / bias (resident, fetched once).
                pl.BlockSpec((M, B), lambda s, t, cnt: (0, 0)),
                pl.BlockSpec((1, B), lambda s, t, cnt: (0, 0)),
            ],
            out_specs=pl.BlockSpec((1, tile_i, B), lambda s, t, cnt: (s, t, 0)),
        ),
        compiler_params=pltpu.CompilerParams(
            dimension_semantics=("parallel", "parallel")),
    )(counts, c_all, a_all, params["w2F"], params["b2F"])

    outs = []
    for i, ((start, end), n) in enumerate(zip(seq_start_end, ns)):
        pooled = out[i, :n, :]                         # (n, B), already x2
        # pooled.repeat(N,1,1) (+ itself) == broadcast over the leading axis.
        outs.append(jnp.broadcast_to(pooled[None, :, :], (n, n, B)))
    return outs


# ----------------------------- parameter setup ------------------------------

def make_params(key, embedding_dim, h_dim, mlp_hidden, bottleneck_dim, eps=1e-5):
    ks = jax.random.split(key, 16)
    E, H, M, B = embedding_dim, h_dim, mlp_hidden, bottleneck_dim

    def lin(k, fan_in, shape):
        return jax.random.normal(k, shape, jnp.float32) / np.sqrt(fan_in)

    ws = lin(ks[0], 2, (2, E))
    bs = lin(ks[1], 2, (1, E))
    w1 = lin(ks[2], E + H, (E + H, M))
    b1 = lin(ks[3], E + H, (1, M))
    g1 = 1.0 + 0.1 * jax.random.normal(ks[4], (1, M), jnp.float32)
    bt1 = 0.1 * jax.random.normal(ks[5], (1, M), jnp.float32)
    m1 = 0.1 * jax.random.normal(ks[6], (1, M), jnp.float32)
    v1 = 0.5 + 0.5 * jnp.abs(jax.random.normal(ks[7], (1, M), jnp.float32))
    w2 = lin(ks[8], M, (M, B))
    b2 = lin(ks[9], M, (1, B))
    g2 = 1.0 + 0.1 * jax.random.normal(ks[10], (1, B), jnp.float32)
    bt2 = 0.1 * jax.random.normal(ks[11], (1, B), jnp.float32)
    m2 = 0.1 * jax.random.normal(ks[12], (1, B), jnp.float32)
    v2 = 0.5 + 0.5 * jnp.abs(jax.random.normal(ks[13], (1, B), jnp.float32))

    # Fold eval-mode BatchNorm directly into the Linear weights / biases.
    s1 = g1 / jnp.sqrt(v1 + eps)
    sh1 = bt1 - m1 * s1
    s2 = g2 / jnp.sqrt(v2 + eps)
    sh2 = bt2 - m2 * s2

    w1aF = w1[:E] * s1                     # (E, M) — spatial-embedding branch
    w1bF = w1[E:] * s1                     # (H, M) — hidden-state branch
    cbias = bs @ w1aF + b1 * s1 + sh1      # (1, M)
    w2F = (w2 * s2).astype(jnp.bfloat16)   # bf16 MXU input, f32 accumulation
    b2F = b2 * s2 + sh2                    # (1, B)

    params = dict(ws=ws, w1aF=w1aF, w1bF=w1bF, cbias=cbias, w2F=w2F, b2F=b2F)
    raw = dict(ws=ws, bs=bs, w1=w1, b1=b1, g1=g1, bt1=bt1, m1=m1, v1=v1,
               w2=w2, b2=b2, g2=g2, bt2=bt2, m2=m2, v2=v2, eps=eps, h_dim=H)
    return params, raw


# ------------------------- pure-numpy reference ------------------------------

def reference_forward(h_states, seq_start_end, end_pos, R):
    h_flat = np.asarray(h_states, np.float32).reshape(-1, R["h_dim"])
    end_pos = np.asarray(end_pos, np.float32)
    P = {k: np.asarray(v, np.float64) for k, v in R.items()
         if k not in ("eps", "h_dim")}
    eps = R["eps"]
    outs = []
    for (start, end) in seq_start_end:
        N = int(end - start)
        hid = h_flat[start:end].astype(np.float64)
        pos = end_pos[start:end].astype(np.float64)
        hid1 = np.tile(hid, (N, 1))
        pos1 = np.tile(pos, (N, 1))
        pos2 = np.repeat(pos, N, axis=0)
        rel = pos1 - pos2
        rel_emb = rel @ P["ws"] + P["bs"]
        x = np.concatenate([rel_emb, hid1], axis=1)
        h1 = x @ P["w1"] + P["b1"]
        h1 = (h1 - P["m1"]) / np.sqrt(P["v1"] + eps) * P["g1"] + P["bt1"]
        h1 = np.maximum(h1, 0.0)
        h2 = h1 @ P["w2"] + P["b2"]
        h2 = (h2 - P["m2"]) / np.sqrt(P["v2"] + eps) * P["g2"] + P["bt2"]
        h2 = np.maximum(h2, 0.0)
        pooled = h2.reshape(N, N, -1).max(axis=1)
        tiled = np.broadcast_to(pooled[None, :, :], (N, N, pooled.shape[1]))
        outs.append((tiled + tiled).astype(np.float32))
    return outs


if __name__ == "__main__":
    key = jax.random.PRNGKey(0)
    k_h, k_p, k_w = jax.random.split(key, 3)

    # Small shapes consistent with the module (the 512-wide MLP hidden layer is
    # hard-coded in PoolHiddenNet.__init__).  Ragged pedestrian counts exercise
    # the padding/masking path.
    embedding_dim, h_dim, mlp_hidden, bottleneck_dim = 32, 32, 512, 128
    num_layers, total_peds = 1, 12
    seq_start_end = ((0, 5), (5, 8), (8, 12))   # 5, 3, 4 pedestrians

    h_states = jax.random.normal(k_h, (num_layers, total_peds, h_dim), jnp.float32)
    end_pos = jax.random.normal(k_p, (total_peds, 2), jnp.float32)
    params, raw = make_params(k_w, embedding_dim, h_dim, mlp_hidden, bottleneck_dim)

    pool_h = pool_hidden_net_forward(h_states, end_pos, params,
                                     seq_start_end=seq_start_end)
    pool_h = [jax.block_until_ready(t) for t in pool_h]

    ref = reference_forward(h_states, seq_start_end, end_pos, raw)
    for got, want in zip(pool_h, ref):
        assert got.shape == want.shape, (got.shape, want.shape)
        # bf16 MXU inputs (f32 accumulation) -> slightly looser tolerance.
        np.testing.assert_allclose(np.asarray(got), want, rtol=2e-2, atol=2e-2)

    print("KERNEL_OK")
</pallas_src>

<mosaic_0001>
module attributes {stable_mosaic.version = 11 : i64} {
  func.func @pool_kernel(%arg0: i32, %arg1: i32, %arg2: memref<3xi32, #tpu.memory_space<smem>>, %arg3: memref<1x8x512xf32, #tpu.memory_space<vmem>>, %arg4: memref<1x8x512xf32, #tpu.memory_space<vmem>>, %arg5: memref<512x128xbf16, #tpu.memory_space<vmem>>, %arg6: memref<1x128xf32, #tpu.memory_space<vmem>>, %arg7: memref<1x8x128xf32, #tpu.memory_space<vmem>>) attributes {dimension_semantics = [#tpu.dimension_semantics<parallel>, #tpu.dimension_semantics<parallel>], iteration_bounds = array<i64: 3, 1>, scalar_prefetch = 1 : i64, scratch_operands = 0 : i64, tpu.core_type = #tpu.core_type<tc>, window_params = [{transform_indices = @transform_0, window_bounds = array<i64: 1, 8, 512>}, {transform_indices = @transform_1, window_bounds = array<i64: 1, 8, 512>}, {pipeline_mode = #tpu.pipeline_mode<synchronous>, transform_indices = @transform_2, window_bounds = array<i64: 512, 128>}, {pipeline_mode = #tpu.pipeline_mode<synchronous>, transform_indices = @transform_3, window_bounds = array<i64: 1, 128>}, {transform_indices = @transform_4, window_bounds = array<i64: 1, 8, 128>}]} {
    %0 = arith.index_cast %arg0 : i32 to index
    %1 = memref.load %arg2[%0] : memref<3xi32, #tpu.memory_space<smem>>
    %c0 = arith.constant 0 : index
    %c0_0 = arith.constant 0 : index
    %c0_1 = arith.constant 0 : index
    %2 = vector.load %arg3[%c0, %c0_0, %c0_1] : memref<1x8x512xf32, #tpu.memory_space<vmem>>, vector<1x8x512xf32>
    %3 = vector.shape_cast %2 : vector<1x8x512xf32> to vector<8x512xf32>
    %c0_2 = arith.constant 0 : index
    %c0_3 = arith.constant 0 : index
    %c0_4 = arith.constant 0 : index
    %4 = vector.load %arg4[%c0_2, %c0_3, %c0_4] : memref<1x8x512xf32, #tpu.memory_space<vmem>>, vector<1x8x512xf32>
    %5 = vector.shape_cast %4 : vector<1x8x512xf32> to vector<8x512xf32>
    %c0_5 = arith.constant 0 : index
    %c0_6 = arith.constant 0 : index
    %6 = vector.load %arg5[%c0_5, %c0_6] : memref<512x128xbf16, #tpu.memory_space<vmem>>, vector<512x128xbf16>
    %c0_7 = arith.constant 0 : index
    %c0_8 = arith.constant 0 : index
    %7 = vector.load %arg6[%c0_7, %c0_8] : memref<1x128xf32, #tpu.memory_space<vmem>>, vector<1x128xf32>
    %8 = vector.shape_cast %3 : vector<8x512xf32> to vector<1x8x512xf32>
    %9 = vector.shape_cast %5 : vector<8x512xf32> to vector<8x1x512xf32>
    %10 = vector.broadcast %8 : vector<1x8x512xf32> to vector<8x8x512xf32>
    %11 = vector.broadcast %9 : vector<8x1x512xf32> to vector<8x8x512xf32>
    %12 = arith.subf %10, %11 : vector<8x8x512xf32>
    %cst = arith.constant 0.000000e+00 : f32
    %13 = vector.broadcast %cst : f32 to vector<8x8x512xf32>
    %14 = arith.maximumf %12, %13 : vector<8x8x512xf32>
    %15 = vector.shape_cast %14 : vector<8x8x512xf32> to vector<64x512xf32>
    %16 = arith.truncf %15 : vector<64x512xf32> to vector<64x512xbf16>
    %cst_9 = arith.constant dense<0.000000e+00> : vector<64x128xf32>
    %17 = tpu.matmul %16, %6, %cst_9 {dimension_numbers = #tpu.dot_dimension_numbers<[1], [0], [0], [1], [0, 0, 1, 1], [], []>} : vector<64x512xbf16>, vector<512x128xbf16>, vector<64x128xf32> -> vector<64x128xf32>
    %18 = vector.broadcast %7 : vector<1x128xf32> to vector<64x128xf32>
    %19 = arith.addf %17, %18 : vector<64x128xf32>
    %cst_10 = arith.constant 0.000000e+00 : f32
    %20 = vector.broadcast %cst_10 : f32 to vector<64x128xf32>
    %21 = arith.maximumf %19, %20 : vector<64x128xf32>
    %22 = vector.shape_cast %21 : vector<64x128xf32> to vector<8x8x128xf32>
    %23 = tpu.iota {dimensions = array<i32: 0>} : vector<8x128xi32>
    %24 = vector.broadcast %1 : i32 to vector<8x128xi32>
    %25 = arith.cmpi slt, %23, %24 : vector<8x128xi32>
    %26 = vector.shape_cast %25 : vector<8x128xi1> to vector<1x8x128xi1>
    %cst_11 = arith.constant 0.000000e+00 : f32
    %27 = vector.shape_cast %26 : vector<1x8x128xi1> to vector<1x8x128xi1>
    %28 = vector.broadcast %27 : vector<1x8x128xi1> to vector<8x8x128xi1>
    %29 = vector.broadcast %cst_11 : f32 to vector<8x8x128xf32>
    %30 = arith.select %28, %22, %29 : vector<8x8x128xi1>, vector<8x8x128xf32>
    %cst_12 = arith.constant dense<0xFF800000> : vector<8x128xf32>
    %31 = vector.multi_reduction <maximumf>, %30, %cst_12 [1] : vector<8x8x128xf32> to vector<8x128xf32>
    %cst_13 = arith.constant 2.000000e+00 : f32
    %32 = vector.broadcast %cst_13 : f32 to vector<8x128xf32>
    %33 = arith.mulf %32, %31 : vector<8x128xf32>
    %c0_14 = arith.constant 0 : index
    %c0_15 = arith.constant 0 : index
    %c0_16 = arith.constant 0 : index
    %34 = vector.load %arg7[%c0_14, %c0_15, %c0_16] : memref<1x8x128xf32, #tpu.memory_space<vmem>>, vector<1x8x128xf32>
    %35 = vector.shape_cast %34 : vector<1x8x128xf32> to vector<8x128xf32>
    %36 = vector.shape_cast %33 : vector<8x128xf32> to vector<1x8x128xf32>
    tpu.vector_store %arg7[%c0_14, %c0_15, %c0_16], %36 {strides = array<i32>} : memref<1x8x128xf32, #tpu.memory_space<vmem>>, vector<1x8x128xf32>,
    return
  }
  func.func @transform_0(%arg0: i32, %arg1: i32, %arg2: memref<3xi32, #tpu.memory_space<smem>>) -> (i32, i32, i32) {
    %c0_i32 = arith.constant 0 : i32
    %c0_i32_0 = arith.constant 0 : i32
    %c0_i32_1 = arith.constant 0 : i32
    return %arg0, %c0_i32, %c0_i32_0 : i32, i32, i32
  }
  func.func @transform_1(%arg0: i32, %arg1: i32, %arg2: memref<3xi32, #tpu.memory_space<smem>>) -> (i32, i32, i32) {
    %c0_i32 = arith.constant 0 : i32
    %c0_i32_0 = arith.constant 0 : i32
    return %arg0, %arg1, %c0_i32 : i32, i32, i32
  }
  func.func @transform_2(%arg0: i32, %arg1: i32, %arg2: memref<3xi32, #tpu.memory_space<smem>>) -> (i32, i32) {
    %c0_i32 = arith.constant 0 : i32
    %c0_i32_0 = arith.constant 0 : i32
    %c0_i32_1 = arith.constant 0 : i32
    return %c0_i32, %c0_i32_0 : i32, i32
  }
  func.func @transform_3(%arg0: i32, %arg1: i32, %arg2: memref<3xi32, #tpu.memory_space<smem>>) -> (i32, i32) {
    %c0_i32 = arith.constant 0 : i32
    %c0_i32_0 = arith.constant 0 : i32
    %c0_i32_1 = arith.constant 0 : i32
    return %c0_i32, %c0_i32_0 : i32, i32
  }
  func.func @transform_4(%arg0: i32, %arg1: i32, %arg2: memref<3xi32, #tpu.memory_space<smem>>) -> (i32, i32, i32) {
    %c0_i32 = arith.constant 0 : i32
    %c0_i32_0 = arith.constant 0 : i32
    return %arg0, %arg1, %c0_i32 : i32, i32, i32
  }
}

</mosaic_0001>

<llo_original>
// kernel: pool_hidden_net_forward.1
$region0: #{pool_hidden_net_forward.1}
  #allocation0 [shape = 'u32[]', space=smem, size = 0x4, offset = 0x4, fixed_abs, tag = 'smem constant byte address 0x4 - core index']
  #allocation1 [shape = 'u32[144,128]{1,0:T(1,128)}', space=vmem, size = 0x12000, scoped, tag = 'internal scratch']
  #allocation2 [shape = 's32[1]{0}', space=sflag, size = 0x4, scoped, tag = 'scoped memory for pool_hidden_net_forward.1']
  #allocation3 [shape = 'u8[512]{0}', space=smem, size = 0x200, scoped, tag = 'prefetched SMEM operand 0']
  %s0 = inlined_call_operand.vmem [shape: s32[3], index: 0, kind: input, shape index: {}]
  %s1 = inlined_call_operand.vmem [shape: f32[3,8,512], index: 1, kind: input, shape index: {}]
  %s2 = inlined_call_operand.vmem [shape: f32[3,8,512], index: 2, kind: input, shape index: {}]
  %s3 = inlined_call_operand.vmem [shape: bf16[512,128], index: 3, kind: input, shape index: {}]
  %s4 = inlined_call_operand.vmem [shape: f32[1,128], index: 4, kind: input, shape index: {}]
  %s5 = inlined_call_operand.vmem [shape: f32[3,8,128], index: 5, kind: output, shape index: {}]
  %s6 = sld [smem:[#allocation0]]
  $region49: #{pool_hidden_net_forward.1} parent=0
    _
  %s8 = ssub.s32 1, %s6
  %s9 = scalar_select 0, %s8, %s6
  %s10 = sshll.u32 %s0, 4
  %s11 = int_to_ptr.vmem [resolvable:$true] %s10
  %13 = dma.vmem_to_smem %s11, 16, [#allocation3], [#allocation2]
  %14 = dma.done [#allocation2], 16
  %15 = sfence
  loop: start=0, step=1, limit=5
  $region2: #{pool_hidden_net_forward.1} parent=0 // loop_pre_header
    _
  $region3: #{pool_hidden_net_forward.1} parent=0 // loop_header
    %s17 = sphi 0, %s21
    %p18 = scmp.ge.s32.totalorder %s17, 5
    %s24 = sphi 0, %s36
    %s25 = sphi 0, %s32
    %s26 = sphi 0, %s24
    %s27 = sphi 0, %s25
    %s28 = sphi 0, %s26
    %s29 = sphi 0, %s27
    %s39 = sphi 0, %s41
    %s42 = sphi 0, %s39
    %s43 = sphi 0, %s42
    %s59 = sphi 0, %s43
    %s67 = sphi 0, %s69
    %s70 = sphi 0, %s67
    %s71 = sphi 0, %s70
    %s87 = sphi 0, %s71
    %s91 = sphi 0, %s91
    %s93 = sphi 0, %s91
    %s94 = sphi 0, %s93
    %s108 = sphi 0, %s94
    %s112 = sphi 0, %s112
    %s114 = sphi 0, %s112
    %s115 = sphi 0, %s114
    %s129 = sphi 0, %s115
    %s137 = sphi 0, %s139
    %s140 = sphi 0, %s137
    %s141 = sphi 0, %s140
    %s157 = sphi 0, %s141
  $region4: #{pool_hidden_net_forward.1} parent=0 // loop_header_branch
    %20 = sbr.rel (%p18) target = $region8
  $region5: #{pool_hidden_net_forward.1} parent=0 // loop_body
    %s22 = ssub.s32 %s17, 1
    %s23 = ssub.s32 %s17, 2
    %s30 = sadd.s32 1, %s25
    %p31 = scmp.ge.s32.totalorder %s30, 1
    %s32 = scalar_select %p31, 0, %s30
    %s33 = sadd.s32 1, %s24
    %s34 = scalar_select %p31, %s33, %s24
    %p35 = scmp.ge.s32.totalorder %s34, 3
    %s36 = scalar_select %p35, 0, %s34
    %s37 = ssub.s32 %s24, %s36
    %p38 = scmp.eq.s32.totalorder %s37, 0
    %s40 = sadd.s32 %s39, 1
    %s41 = scalar_select %p38, %s39, %s40
    %p44 = pneg %p38
    %p45 = scmp.eq.s32.totalorder %s17, 2
    %p46 = por %p44, %p45
    %p47 = scmp.ne.s32.totalorder %s39, %s42
    %p48 = scmp.eq.s32.totalorder %s17, 0
    %p49 = por %p47, %p48
    %p50 = scmp.ne.s32.totalorder %s39, %s42
    %p51 = scmp.eq.s32.totalorder %s22, 2
    %p52 = por %p50, %p51
    %p53 = scmp.ne.s32.totalorder %s42, %s43
    %p54 = scmp.eq.s32.totalorder %s22, 0
    %p55 = por %p53, %p54
    %p56 = scmp.ne.s32.totalorder %s42, %s43
    %p57 = scmp.eq.s32.totalorder %s23, 2
    %p58 = por %p56, %p57
    %p60 = scmp.ne.s32.totalorder %s43, %s59
    %p61 = scmp.eq.s32.totalorder %s23, 0
    %p62 = por %p60, %p61
    %s63 = ssub.s32 %s24, %s36
    %s64 = ssub.s32 %s25, %s32
    %s65 = sor.u32 %s63, %s64
    %p66 = scmp.eq.s32.totalorder %s65, 0
    %s68 = sadd.s32 %s67, 1
    %s69 = scalar_select %p66, %s67, %s68
    %p72 = pneg %p66
    %p73 = scmp.eq.s32.totalorder %s17, 2
    %p74 = por %p72, %p73
    %p75 = scmp.ne.s32.totalorder %s67, %s70
    %p76 = scmp.eq.s32.totalorder %s17, 0
    %p77 = por %p75, %p76
    %p78 = scmp.ne.s32.totalorder %s67, %s70
    %p79 = scmp.eq.s32.totalorder %s22, 2
    %p80 = por %p78, %p79
    %p81 = scmp.ne.s32.totalorder %s70, %s71
    %p82 = scmp.eq.s32.totalorder %s22, 0
    %p83 = por %p81, %p82
    %p84 = scmp.ne.s32.totalorder %s70, %s71
    %p85 = scmp.eq.s32.totalorder %s23, 2
    %p86 = por %p84, %p85
    %p88 = scmp.ne.s32.totalorder %s71, %s87
    %p89 = scmp.eq.s32.totalorder %s23, 0
    %p90 = por %p88, %p89
    %s92 = sadd.s32 %s91, 1
    %p95 = scmp.eq.s32.totalorder %s17, 2
    %p96 = scmp.ne.s32.totalorder %s91, %s93
    %p97 = scmp.eq.s32.totalorder %s17, 0
    %p98 = por %p96, %p97
    %p99 = scmp.ne.s32.totalorder %s91, %s93
    %p100 = scmp.eq.s32.totalorder %s22, 2
    %p101 = por %p99, %p100
    %p102 = scmp.ne.s32.totalorder %s93, %s94
    %p103 = scmp.eq.s32.totalorder %s22, 0
    %p104 = por %p102, %p103
    %p105 = scmp.ne.s32.totalorder %s93, %s94
    %p106 = scmp.eq.s32.totalorder %s23, 2
    %p107 = por %p105, %p106
    %p109 = scmp.ne.s32.totalorder %s94, %s108
    %p110 = scmp.eq.s32.totalorder %s23, 0
    %p111 = por %p109, %p110
    %s113 = sadd.s32 %s112, 1
    %p116 = scmp.eq.s32.totalorder %s17, 2
    %p117 = scmp.ne.s32.totalorder %s112, %s114
    %p118 = scmp.eq.s32.totalorder %s17, 0
    %p119 = por %p117, %p118
    %p120 = scmp.ne.s32.totalorder %s112, %s114
    %p121 = scmp.eq.s32.totalorder %s22, 2
    %p122 = por %p120, %p121
    %p123 = scmp.ne.s32.totalorder %s114, %s115
    %p124 = scmp.eq.s32.totalorder %s22, 0
    %p125 = por %p123, %p124
    %p126 = scmp.ne.s32.totalorder %s114, %s115
    %p127 = scmp.eq.s32.totalorder %s23, 2
    %p128 = por %p126, %p127
    %p130 = scmp.ne.s32.totalorder %s115, %s129
    %p131 = scmp.eq.s32.totalorder %s23, 0
    %p132 = por %p130, %p131
    %s133 = ssub.s32 %s24, %s36
    %s134 = ssub.s32 %s25, %s32
    %s135 = sor.u32 %s133, %s134
    %p136 = scmp.eq.s32.totalorder %s135, 0
    %s138 = sadd.s32 %s137, 1
    %s139 = scalar_select %p136, %s137, %s138
    %p142 = pneg %p136
    %p143 = scmp.eq.s32.totalorder %s17, 2
    %p144 = por %p142, %p143
    %p145 = scmp.ne.s32.totalorder %s137, %s140
    %p146 = scmp.eq.s32.totalorder %s17, 0
    %p147 = por %p145, %p146
    %p148 = scmp.ne.s32.totalorder %s137, %s140
    %p149 = scmp.eq.s32.totalorder %s22, 2
    %p150 = por %p148, %p149
    %p151 = scmp.ne.s32.totalorder %s140, %s141
    %p152 = scmp.eq.s32.totalorder %s22, 0
    %p153 = por %p151, %p152
    %p154 = scmp.ne.s32.totalorder %s140, %s141
    %p155 = scmp.eq.s32.totalorder %s23, 2
    %p156 = por %p154, %p155
    %p158 = scmp.ne.s32.totalorder %s141, %s157
    %p159 = scmp.eq.s32.totalorder %s23, 0
    %p160 = por %p158, %p159
    %p161 = scmp.le.s32.totalorder 1, %s17
    %p162 = scmp.lt.s32.totalorder %s17, 4
    %p163 = pnand %p161, %p162
    %p164 = pneg %p163
    // Predicated region
    $region9: #{pool_hidden_net_forward.1} parent=5 // pred_check
      _
    $region10: #{pool_hidden_net_forward.1} parent=5 // pred_check_branch
      %166 = sbr.rel (%p163) target = $region12
    $region11: #{pool_hidden_net_forward.1} parent=5 // pred_region
      %s167 = ssub.s32 %s17, 1
      // Predicated region
      $region13: #{pool_hidden_net_forward.1} parent=11 // pred_check
        %p168 = pneg %p104
      $region14: #{pool_hidden_net_forward.1} parent=11 // pred_check_branch
        %170 = sbr.rel (%p168) target = $region16
      $region15: #{pool_hidden_net_forward.1} parent=11 // pred_region
        _
      $region16: #{pool_hidden_net_forward.1} parent=11 // pred_fallthru
        _
      // Predicated region
      $region17: #{pool_hidden_net_forward.1} parent=11 // pred_check
        %p171 = pneg %p125
      $region18: #{pool_hidden_net_forward.1} parent=11 // pred_check_branch
        %173 = sbr.rel (%p171) target = $region20
      $region19: #{pool_hidden_net_forward.1} parent=11 // pred_region
        _
      $region20: #{pool_hidden_net_forward.1} parent=11 // pred_fallthru
        _
    $region12: #{pool_hidden_net_forward.1} parent=5 // pred_fallthru
      _
    %p174 = scmp.lt.s32.totalorder %s17, 3
    // Predicated region
    $region21: #{pool_hidden_net_forward.1} parent=5 // pred_check
      %p175 = pneg %p174
    $region22: #{pool_hidden_net_forward.1} parent=5 // pred_check_branch
      %177 = sbr.rel (%p175) target = $region24
    $region23: #{pool_hidden_net_forward.1} parent=5 // pred_region
      // Predicated region
      $region25: #{pool_hidden_net_forward.1} parent=23 // pred_check
        %p178 = pneg %p49
      $region26: #{pool_hidden_net_forward.1} parent=23 // pred_check_branch
        %180 = sbr.rel (%p178) target = $region28
      $region27: #{pool_hidden_net_forward.1} parent=23 // pred_region
        %p181 = scmp.lt.s32.totalorder %s24, 2
        %s182 = scalar_select %p181, %s24, 2
        %s183 = smul.addr %s182, 4
        %s184 = smul.addr %s183, 8
        %s185 = scalar_lea.vmem %s1, %s184
      $region28: #{pool_hidden_net_forward.1} parent=23 // pred_fallthru
        _
      // Predicated region
      $region29: #{pool_hidden_net_forward.1} parent=23 // pred_check
        %p186 = pneg %p77
      $region30: #{pool_hidden_net_forward.1} parent=23 // pred_check_branch
        %188 = sbr.rel (%p186) target = $region32
      $region31: #{pool_hidden_net_forward.1} parent=23 // pred_region
        %p189 = scmp.lt.s32.totalorder %s24, 2
        %s190 = scalar_select %p189, %s24, 2
        %p191 = scmp.lt.s32.totalorder %s25, 0
        %s192 = scalar_select %p191, %s25, 0
        %s193 = smul.addr %s192, 4
        %s194 = smul.addr %s190, 4
        %s195 = sadd.s32 %s193, %s194
        %s196 = smul.addr %s195, 8
        %s197 = scalar_lea.vmem %s2, %s196
      $region32: #{pool_hidden_net_forward.1} parent=23 // pred_fallthru
        _
    $region24: #{pool_hidden_net_forward.1} parent=5 // pred_fallthru
      _
    %p198 = scmp.le.s32.totalorder 1, %s17
    %p199 = scmp.lt.s32.totalorder %s17, 4
    %p200 = pnand %p198, %p199
    %p201 = pneg %p200
    // Predicated region
    $region33: #{pool_hidden_net_forward.1} parent=5 // pred_check
      _
    $region34: #{pool_hidden_net_forward.1} parent=5 // pred_check_branch
      %203 = sbr.rel (%p200) target = $region36
    $region35: #{pool_hidden_net_forward.1} parent=5 // pred_region
      %s204 = ssub.s32 %s17, 1
      %p205 = scmp.lt.s32.totalorder %s26, 2
      %s206 = scalar_select %p205, %s26, 2
      %s207 = smul.addr %s206, 4
      %s208 = smul.addr %s207, 8
      %s209 = scalar_lea.vmem %s1, %s208
      %p210 = pneg %p55
      %p211 = pneg %p52
      %p212 = scmp.lt.s32.totalorder %s26, 2
      %s213 = scalar_select %p212, %s26, 2
      %p214 = scmp.lt.s32.totalorder %s27, 0
      %s215 = scalar_select %p214, %s27, 0
      %s216 = smul.addr %s215, 4
      %s217 = smul.addr %s213, 4
      %s218 = sadd.s32 %s216, %s217
      %s219 = smul.addr %s218, 8
      %s220 = scalar_lea.vmem %s2, %s219
      %p221 = pneg %p83
      %p222 = pneg %p80
      %p223 = pneg %p104
      %p224 = pneg %p101
      %p225 = pneg %p125
      %p226 = pneg %p122
      %p227 = pneg %p153
      %p228 = pneg %p150
      %p229 = scmp.lt.s32.totalorder %s26, 2
      %s230 = scalar_select %p229, %s26, 2
      %p231 = scmp.lt.s32.totalorder %s27, 0
      %s232 = scalar_select %p231, %s27, 0
      %s233 = sadd.s32 %s232, %s230
      %s234 = smul.addr %s233, 8
      %s235 = scalar_lea.vmem %s5, %s234
      %p236 = scmp.lt.s32.totalorder %s26, 2
      %s237 = scalar_select %p236, %s26, 2
      %s238 = smul.addr %s237, 4
      %s239 = smul.addr %s238, 8
      %s240 = scalar_lea.vmem %s1, %s239
      %p241 = scmp.lt.s32.totalorder %s26, 2
      %s242 = scalar_select %p241, %s26, 2
      %p243 = scmp.lt.s32.totalorder %s27, 0
      %s244 = scalar_select %p243, %s27, 0
      %s245 = smul.addr %s244, 4
      %s246 = smul.addr %s242, 4
      %s247 = sadd.s32 %s245, %s246
      %s248 = smul.addr %s247, 8
      %s249 = scalar_lea.vmem %s2, %s248
      %p250 = scmp.lt.s32.totalorder %s26, 2
      %s251 = scalar_select %p250, %s26, 2
      %p252 = scmp.lt.s32.totalorder %s27, 0
      %s253 = scalar_select %p252, %s27, 0
      %s254 = sadd.s32 %s253, %s251
      %s255 = smul.addr %s254, 8
      %s256 = scalar_lea.vmem %s5, %s255
      %s258 = sld [smem:[#allocation3 + %s26]]
      %v259 = vld [vmem:[%s240] sm:$0xff]
      %v260 = vld [vmem:[%s240 + $0x8] sm:$0xff]
      %v261 = vld [vmem:[%s240 + $0x10] sm:$0xff]
      %v262 = vld [vmem:[%s240 + $0x18] sm:$0xff]
      %v263 = vld [vmem:[%s249] sm:$0xff]
      %v264 = vld [vmem:[%s249 + $0x8] sm:$0xff]
      %v265 = vld [vmem:[%s249 + $0x10] sm:$0xff]
      %v266 = vld [vmem:[%s249 + $0x18] sm:$0xff]
      %v267 = vld [vmem:[%s3] sm:$0xf]
      %v268 = vld [vmem:[%s3 + $0x4] sm:$0xf]
      %v269 = vld [vmem:[%s3 + $0x8] sm:$0xf]
      %v270 = vld [vmem:[%s3 + $0xc] sm:$0xf]
      %v271 = vld [vmem:[%s3 + $0x10] sm:$0xf]
      %v272 = vld [vmem:[%s3 + $0x14] sm:$0xf]
      %v273 = vld [vmem:[%s3 + $0x18] sm:$0xf]
      %v274 = vld [vmem:[%s3 + $0x1c] sm:$0xf]
      %v275 = vld [vmem:[%s3 + $0x20] sm:$0xf]
      %v276 = vld [vmem:[%s3 + $0x24] sm:$0xf]
      %v277 = vld [vmem:[%s3 + $0x28] sm:$0xf]
      %v278 = vld [vmem:[%s3 + $0x2c] sm:$0xf]
      %v279 = vld [vmem:[%s3 + $0x30] sm:$0xf]
      %v280 = vld [vmem:[%s3 + $0x34] sm:$0xf]
      %v281 = vld [vmem:[%s3 + $0x38] sm:$0xf]
      %v282 = vld [vmem:[%s3 + $0x3c] sm:$0xf]
      %v283 = vld [vmem:[%s3 + $0x40] sm:$0xf]
      %v284 = vld [vmem:[%s3 + $0x44] sm:$0xf]
      %v285 = vld [vmem:[%s3 + $0x48] sm:$0xf]
      %v286 = vld [vmem:[%s3 + $0x4c] sm:$0xf]
      %v287 = vld [vmem:[%s3 + $0x50] sm:$0xf]
      %v288 = vld [vmem:[%s3 + $0x54] sm:$0xf]
      %v289 = vld [vmem:[%s3 + $0x58] sm:$0xf]
      %v290 = vld [vmem:[%s3 + $0x5c] sm:$0xf]
      %v291 = vld [vmem:[%s3 + $0x60] sm:$0xf]
      %v292 = vld [vmem:[%s3 + $0x64] sm:$0xf]
      %v293 = vld [vmem:[%s3 + $0x68] sm:$0xf]
      %v294 = vld [vmem:[%s3 + $0x6c] sm:$0xf]
      %v295 = vld [vmem:[%s3 + $0x70] sm:$0xf]
      %v296 = vld [vmem:[%s3 + $0x74] sm:$0xf]
      %v297 = vld [vmem:[%s3 + $0x78] sm:$0xf]
      %v298 = vld [vmem:[%s3 + $0x7c] sm:$0xf]
      %v299 = vld [vmem:[%s3 + $0x80] sm:$0xf]
      %v300 = vld [vmem:[%s3 + $0x84] sm:$0xf]
      %v301 = vld [vmem:[%s3 + $0x88] sm:$0xf]
      %v302 = vld [vmem:[%s3 + $0x8c] sm:$0xf]
      %v303 = vld [vmem:[%s3 + $0x90] sm:$0xf]
      %v304 = vld [vmem:[%s3 + $0x94] sm:$0xf]
      %v305 = vld [vmem:[%s3 + $0x98] sm:$0xf]
      %v306 = vld [vmem:[%s3 + $0x9c] sm:$0xf]
      %v307 = vld [vmem:[%s3 + $0xa0] sm:$0xf]
      %v308 = vld [vmem:[%s3 + $0xa4] sm:$0xf]
      %v309 = vld [vmem:[%s3 + $0xa8] sm:$0xf]
      %v310 = vld [vmem:[%s3 + $0xac] sm:$0xf]
      %v311 = vld [vmem:[%s3 + $0xb0] sm:$0xf]
      %v312 = vld [vmem:[%s3 + $0xb4] sm:$0xf]
      %v313 = vld [vmem:[%s3 + $0xb8] sm:$0xf]
      %v314 = vld [vmem:[%s3 + $0xbc] sm:$0xf]
      %v315 = vld [vmem:[%s3 + $0xc0] sm:$0xf]
      %v316 = vld [vmem:[%s3 + $0xc4] sm:$0xf]
      %v317 = vld [vmem:[%s3 + $0xc8] sm:$0xf]
      %v318 = vld [vmem:[%s3 + $0xcc] sm:$0xf]
      %v319 = vld [vmem:[%s3 + $0xd0] sm:$0xf]
      %v320 = vld [vmem:[%s3 + $0xd4] sm:$0xf]
      %v321 = vld [vmem:[%s3 + $0xd8] sm:$0xf]
      %v322 = vld [vmem:[%s3 + $0xdc] sm:$0xf]
      %v323 = vld [vmem:[%s3 + $0xe0] sm:$0xf]
      %v324 = vld [vmem:[%s3 + $0xe4] sm:$0xf]
      %v325 = vld [vmem:[%s3 + $0xe8] sm:$0xf]
      %v326 = vld [vmem:[%s3 + $0xec] sm:$0xf]
      %v327 = vld [vmem:[%s3 + $0xf0] sm:$0xf]
      %v328 = vld [vmem:[%s3 + $0xf4] sm:$0xf]
      %v329 = vld [vmem:[%s3 + $0xf8] sm:$0xf]
      %v330 = vld [vmem:[%s3 + $0xfc] sm:$0xf]
      %v331 = vld [vmem:[%s4] sm:$0x1]
      %v336 = vcombine.low %v263, %v264
      %v337 = vcombine.high %v263, %v264
      %v338 = vcombine.low %v265, %v266
      %v339 = vcombine.high %v265, %v266
      %v341 = vunpack.c.l.s4 1966171168
      %v342 = vunpack.c.0.s8 %v341
      %v343 = vlaneseq
      %v344 = vshrl.u32 %v343, 7
      %v345 = vsub.s32 %v342, %v344
      %v346 = vrot.slane %v336, %v345
      %v348 = vunpack.c.l.s4 1966171168
      %v349 = vunpack.c.0.s8 %v348
      %v350 = vlaneseq
      %v351 = vshrl.u32 %v350, 7
      %v352 = vsub.s32 %v349, %v351
      %v353 = vrot.slane %v337, %v352
      %v355 = vunpack.c.l.s4 1966171168
      %v356 = vunpack.c.0.s8 %v355
      %v357 = vlaneseq
      %v358 = vshrl.u32 %v357, 7
      %v359 = vsub.s32 %v356, %v358
      %v360 = vrot.slane %v338, %v359
      %v362 = vunpack.c.l.s4 1966171168
      %v363 = vunpack.c.0.s8 %v362
      %v364 = vlaneseq
      %v365 = vshrl.u32 %v364, 7
      %v366 = vsub.s32 %v363, %v365
      %v367 = vrot.slane %v339, %v366
      %v368 = vcombine.low %v346, %v360
      %v369 = vcombine.high %v346, %v360
      %v370 = vcombine.low %v353, %v367
      %v371 = vcombine.high %v353, %v367
      %v373 = vunpack.c.l.s4 1966171168
      %v374 = vunpack.c.0.s8 %v373
      %v375 = vlaneseq
      %v376 = vshrl.u32 %v375, 7
      %v377 = vsub.s32 %v374, %v376
      %v378 = vrot.slane %v368, %v377
      %v380 = vunpack.c.l.s4 1966171168
      %v381 = vunpack.c.0.s8 %v380
      %v382 = vlaneseq
      %v383 = vshrl.u32 %v382, 7
      %v384 = vsub.s32 %v381, %v383
      %v385 = vrot.slane %v370, %v384
      %v387 = vunpack.c.l.s4 1966171168
      %v388 = vunpack.c.0.s8 %v387
      %v389 = vlaneseq
      %v390 = vshrl.u32 %v389, 7
      %v391 = vsub.s32 %v388, %v390
      %v392 = vrot.slane %v369, %v391
      %v394 = vunpack.c.l.s4 1966171168
      %v395 = vunpack.c.0.s8 %v394
      %v396 = vlaneseq
      %v397 = vshrl.u32 %v396, 7
      %v398 = vsub.s32 %v395, %v397
      %v399 = vrot.slane %v371, %v398
      %v400 = vcombine.high %v378, %v378
      %v401 = vcombine.high %v385, %v385
      %v402 = vcombine.high %v392, %v392
      %v403 = vcombine.high %v399, %v399
      %v404 = vlaneseq
      %v405 = vshrl.u32 %v404, 7
      %v406 = vsub.s32 0, %v405
      %v407 = vrot.slane %v378, %v406
      %v408 = vlaneseq
      %v409 = vshrl.u32 %v408, 7
      %v410 = vsub.s32 1, %v409
      %v411 = vrot.slane %v378, %v410
      %v412 = vlaneseq
      %v413 = vshrl.u32 %v412, 7
      %v414 = vsub.s32 2, %v413
      %v415 = vrot.slane %v378, %v414
      %v416 = vlaneseq
      %v417 = vshrl.u32 %v416, 7
      %v418 = vsub.s32 3, %v417
      %v419 = vrot.slane %v378, %v418
      %v420 = vlaneseq
      %v421 = vshrl.u32 %v420, 7
      %v422 = vsub.s32 0, %v421
      %v423 = vrot.slane %v392, %v422
      %v424 = vlaneseq
      %v425 = vshrl.u32 %v424, 7
      %v426 = vsub.s32 1, %v425
      %v427 = vrot.slane %v392, %v426
      %v428 = vlaneseq
      %v429 = vshrl.u32 %v428, 7
      %v430 = vsub.s32 2, %v429
      %v431 = vrot.slane %v392, %v430
      %v432 = vlaneseq
      %v433 = vshrl.u32 %v432, 7
      %v434 = vsub.s32 3, %v433
      %v435 = vrot.slane %v392, %v434
      %v436 = vlaneseq
      %v437 = vshrl.u32 %v436, 7
      %v438 = vsub.s32 0, %v437
      %v439 = vrot.slane %v400, %v438
      %v440 = vlaneseq
      %v441 = vshrl.u32 %v440, 7
      %v442 = vsub.s32 1, %v441
      %v443 = vrot.slane %v400, %v442
      %v444 = vlaneseq
      %v445 = vshrl.u32 %v444, 7
      %v446 = vsub.s32 2, %v445
      %v447 = vrot.slane %v400, %v446
      %v448 = vlaneseq
      %v449 = vshrl.u32 %v448, 7
      %v450 = vsub.s32 3, %v449
      %v451 = vrot.slane %v400, %v450
      %v452 = vlaneseq
      %v453 = vshrl.u32 %v452, 7
      %v454 = vsub.s32 0, %v453
      %v455 = vrot.slane %v402, %v454
      %v456 = vlaneseq
      %v457 = vshrl.u32 %v456, 7
      %v458 = vsub.s32 1, %v457
      %v459 = vrot.slane %v402, %v458
      %v460 = vlaneseq
      %v461 = vshrl.u32 %v460, 7
      %v462 = vsub.s32 2, %v461
      %v463 = vrot.slane %v402, %v462
      %v464 = vlaneseq
      %v465 = vshrl.u32 %v464, 7
      %v466 = vsub.s32 3, %v465
      %v467 = vrot.slane %v402, %v466
      %v468 = vlaneseq
      %v469 = vshrl.u32 %v468, 7
      %v470 = vsub.s32 0, %v469
      %v471 = vrot.slane %v385, %v470
      %v472 = vlaneseq
      %v473 = vshrl.u32 %v472, 7
      %v474 = vsub.s32 1, %v473
      %v475 = vrot.slane %v385, %v474
      %v476 = vlaneseq
      %v477 = vshrl.u32 %v476, 7
      %v478 = vsub.s32 2, %v477
      %v479 = vrot.slane %v385, %v478
      %v480 = vlaneseq
      %v481 = vshrl.u32 %v480, 7
      %v482 = vsub.s32 3, %v481
      %v483 = vrot.slane %v385, %v482
      %v484 = vlaneseq
      %v485 = vshrl.u32 %v484, 7
      %v486 = vsub.s32 0, %v485
      %v487 = vrot.slane %v399, %v486
      %v488 = vlaneseq
      %v489 = vshrl.u32 %v488, 7
      %v490 = vsub.s32 1, %v489
      %v491 = vrot.slane %v399, %v490
      %v492 = vlaneseq
      %v493 = vshrl.u32 %v492, 7
      %v494 = vsub.s32 2, %v493
      %v495 = vrot.slane %v399, %v494
      %v496 = vlaneseq
      %v497 = vshrl.u32 %v496, 7
      %v498 = vsub.s32 3, %v497
      %v499 = vrot.slane %v399, %v498
      %v500 = vlaneseq
      %v501 = vshrl.u32 %v500, 7
      %v502 = vsub.s32 0, %v501
      %v503 = vrot.slane %v401, %v502
      %v504 = vlaneseq
      %v505 = vshrl.u32 %v504, 7
      %v506 = vsub.s32 1, %v505
      %v507 = vrot.slane %v401, %v506
      %v508 = vlaneseq
      %v509 = vshrl.u32 %v508, 7
      %v510 = vsub.s32 2, %v509
      %v511 = vrot.slane %v401, %v510
      %v512 = vlaneseq
      %v513 = vshrl.u32 %v512, 7
      %v514 = vsub.s32 3, %v513
      %v515 = vrot.slane %v401, %v514
      %v516 = vlaneseq
      %v517 = vshrl.u32 %v516, 7
      %v518 = vsub.s32 0, %v517
      %v519 = vrot.slane %v403, %v518
      %v520 = vlaneseq
      %v521 = vshrl.u32 %v520, 7
      %v522 = vsub.s32 1, %v521
      %v523 = vrot.slane %v403, %v522
      %v524 = vlaneseq
      %v525 = vshrl.u32 %v524, 7
      %v526 = vsub.s32 2, %v525
      %v527 = vrot.slane %v403, %v526
      %v528 = vlaneseq
      %v529 = vshrl.u32 %v528, 7
      %v530 = vsub.s32 3, %v529
      %v531 = vrot.slane %v403, %v530
      %v564 = vsub.f32 %v259, %v407
      %v565 = vsub.f32 %v260, %v411
      %v566 = vsub.f32 %v261, %v415
      %v567 = vsub.f32 %v262, %v419
      %v568 = vsub.f32 %v259, %v423
      %v569 = vsub.f32 %v260, %v427
      %v570 = vsub.f32 %v261, %v431
      %v571 = vsub.f32 %v262, %v435
      %v572 = vsub.f32 %v259, %v439
      %v573 = vsub.f32 %v260, %v443
      %v574 = vsub.f32 %v261, %v447
      %v575 = vsub.f32 %v262, %v451
      %v576 = vsub.f32 %v259, %v455
      %v577 = vsub.f32 %v260, %v459
      %v578 = vsub.f32 %v261, %v463
      %v579 = vsub.f32 %v262, %v467
      %v580 = vsub.f32 %v259, %v471
      %v581 = vsub.f32 %v260, %v475
      %v582 = vsub.f32 %v261, %v479
      %v583 = vsub.f32 %v262, %v483
      %v584 = vsub.f32 %v259, %v487
      %v585 = vsub.f32 %v260, %v491
      %v586 = vsub.f32 %v261, %v495
      %v587 = vsub.f32 %v262, %v499
      %v588 = vsub.f32 %v259, %v503
      %v589 = vsub.f32 %v260, %v507
      %v590 = vsub.f32 %v261, %v511
      %v591 = vsub.f32 %v262, %v515
      %v592 = vsub.f32 %v259, %v519
      %v593 = vsub.f32 %v260, %v523
      %v594 = vsub.f32 %v261, %v527
      %v595 = vsub.f32 %v262, %v531
      %v596 = vmax.f32 %v564, 0.0
      %v597 = vmax.f32 %v565, 0.0
      %v598 = vmax.f32 %v566, 0.0
      %v599 = vmax.f32 %v567, 0.0
      %v600 = vmax.f32 %v568, 0.0
      %v601 = vmax.f32 %v569, 0.0
      %v602 = vmax.f32 %v570, 0.0
      %v603 = vmax.f32 %v571, 0.0
      %v604 = vmax.f32 %v572, 0.0
      %v605 = vmax.f32 %v573, 0.0
      %v606 = vmax.f32 %v574, 0.0
      %v607 = vmax.f32 %v575, 0.0
      %v608 = vmax.f32 %v576, 0.0
      %v609 = vmax.f32 %v577, 0.0
      %v610 = vmax.f32 %v578, 0.0
      %v611 = vmax.f32 %v579, 0.0
      %v612 = vmax.f32 %v580, 0.0
      %v613 = vmax.f32 %v581, 0.0
      %v614 = vmax.f32 %v582, 0.0
      %v615 = vmax.f32 %v583, 0.0
      %v616 = vmax.f32 %v584, 0.0
      %v617 = vmax.f32 %v585, 0.0
      %v618 = vmax.f32 %v586, 0.0
      %v619 = vmax.f32 %v587, 0.0
      %v620 = vmax.f32 %v588, 0.0
      %v621 = vmax.f32 %v589, 0.0
      %v622 = vmax.f32 %v590, 0.0
      %v623 = vmax.f32 %v591, 0.0
      %v624 = vmax.f32 %v592, 0.0
      %v625 = vmax.f32 %v593, 0.0
      %v626 = vmax.f32 %v594, 0.0
      %v627 = vmax.f32 %v595, 0.0
      %v628 = vpack.c.bf16 %v600, %v596
      %v629 = vpack.c.bf16 %v601, %v597
      %v630 = vpack.c.bf16 %v602, %v598
      %v631 = vpack.c.bf16 %v603, %v599
      %v632 = vpack.c.bf16 %v608, %v604
      %v633 = vpack.c.bf16 %v609, %v605
      %v634 = vpack.c.bf16 %v610, %v606
      %v635 = vpack.c.bf16 %v611, %v607
      %v636 = vpack.c.bf16 %v616, %v612
      %v637 = vpack.c.bf16 %v617, %v613
      %v638 = vpack.c.bf16 %v618, %v614
      %v639 = vpack.c.bf16 %v619, %v615
      %v640 = vpack.c.bf16 %v624, %v620
      %v641 = vpack.c.bf16 %v625, %v621
      %v642 = vpack.c.bf16 %v626, %v622
      %v643 = vpack.c.bf16 %v627, %v623
      %v645 = vlaneseq
      %v646 = vshrl.u32 %v645, 7
      %v647 = vsub.s32 0, %v646
      %v648 = vrot.slane %v331, %v647
      %v714 = vunpack.c.l.b16 %v267
      %v715 = vunpack.c.l.b16 %v268
      %v716 = vunpack.c.l.b16 %v269
      %v717 = vunpack.c.l.b16 %v270
      %v718 = vunpack.c.l.b16 %v271
      %v719 = vunpack.c.l.b16 %v272
      %v720 = vunpack.c.l.b16 %v273
      %v721 = vunpack.c.l.b16 %v274
      %v722 = vunpack.c.l.b16 %v275
      %v723 = vunpack.c.l.b16 %v276
      %v724 = vunpack.c.l.b16 %v277
      %v725 = vunpack.c.l.b16 %v278
      %v726 = vunpack.c.l.b16 %v279
      %v727 = vunpack.c.l.b16 %v280
      %v728 = vunpack.c.l.b16 %v281
      %v729 = vunpack.c.l.b16 %v282
      %v730 = vunpack.c.l.b16 %v283
      %v731 = vunpack.c.l.b16 %v284
      %v732 = vunpack.c.l.b16 %v285
      %v733 = vunpack.c.l.b16 %v286
      %v734 = vunpack.c.l.b16 %v287
      %v735 = vunpack.c.l.b16 %v288
      %v736 = vunpack.c.l.b16 %v289
      %v737 = vunpack.c.l.b16 %v290
      %v738 = vunpack.c.l.b16 %v291
      %v739 = vunpack.c.l.b16 %v292
      %v740 = vunpack.c.l.b16 %v293
      %v741 = vunpack.c.l.b16 %v294
      %v742 = vunpack.c.l.b16 %v295
      %v743 = vunpack.c.l.b16 %v296
      %v744 = vunpack.c.l.b16 %v297
      %v745 = vunpack.c.l.b16 %v298
      %v746 = vunpack.c.l.b16 %v299
      %v747 = vunpack.c.l.b16 %v300
      %v748 = vunpack.c.l.b16 %v301
      %v749 = vunpack.c.l.b16 %v302
      %v750 = vunpack.c.l.b16 %v303
      %v751 = vunpack.c.l.b16 %v304
      %v752 = vunpack.c.l.b16 %v305
      %v753 = vunpack.c.l.b16 %v306
      %v754 = vunpack.c.l.b16 %v307
      %v755 = vunpack.c.l.b16 %v308
      %v756 = vunpack.c.l.b16 %v309
      %v757 = vunpack.c.l.b16 %v310
      %v758 = vunpack.c.l.b16 %v311
      %v759 = vunpack.c.l.b16 %v312
      %v760 = vunpack.c.l.b16 %v313
      %v761 = vunpack.c.l.b16 %v314
      %v762 = vunpack.c.l.b16 %v315
      %v763 = vunpack.c.l.b16 %v316
      %v764 = vunpack.c.l.b16 %v317
      %v765 = vunpack.c.l.b16 %v318
      %v766 = vunpack.c.l.b16 %v319
      %v767 = vunpack.c.l.b16 %v320
      %v768 = vunpack.c.l.b16 %v321
      %v769 = vunpack.c.l.b16 %v322
      %v770 = vunpack.c.l.b16 %v323
      %v771 = vunpack.c.l.b16 %v324
      %v772 = vunpack.c.l.b16 %v325
      %v773 = vunpack.c.l.b16 %v326
      %v774 = vunpack.c.l.b16 %v327
      %v775 = vunpack.c.l.b16 %v328
      %v776 = vunpack.c.l.b16 %v329
      %v777 = vunpack.c.l.b16 %v330
      %v778 = vpack.c.b16 %v715, %v714
      %v779 = vpack.c.b16 %v717, %v716
      %v780 = vpack.c.b16 %v719, %v718
      %v781 = vpack.c.b16 %v721, %v720
      %v782 = vpack.c.b16 %v723, %v722
      %v783 = vpack.c.b16 %v725, %v724
      %v784 = vpack.c.b16 %v727, %v726
      %v785 = vpack.c.b16 %v729, %v728
      %v786 = vpack.c.b16 %v731, %v730
      %v787 = vpack.c.b16 %v733, %v732
      %v788 = vpack.c.b16 %v735, %v734
      %v789 = vpack.c.b16 %v737, %v736
      %v790 = vpack.c.b16 %v739, %v738
      %v791 = vpack.c.b16 %v741, %v740
      %v792 = vpack.c.b16 %v743, %v742
      %v793 = vpack.c.b16 %v745, %v744
      %v794 = vpack.c.b16 %v747, %v746
      %v795 = vpack.c.b16 %v749, %v748
      %v796 = vpack.c.b16 %v751, %v750
      %v797 = vpack.c.b16 %v753, %v752
      %v798 = vpack.c.b16 %v755, %v754
      %v799 = vpack.c.b16 %v757, %v756
      %v800 = vpack.c.b16 %v759, %v758
      %v801 = vpack.c.b16 %v761, %v760
      %v802 = vpack.c.b16 %v763, %v762
      %v803 = vpack.c.b16 %v765, %v764
      %v804 = vpack.c.b16 %v767, %v766
      %v805 = vpack.c.b16 %v769, %v768
      %v806 = vpack.c.b16 %v771, %v770
      %v807 = vpack.c.b16 %v773, %v772
      %v808 = vpack.c.b16 %v775, %v774
      %v809 = vpack.c.b16 %v777, %v776
      %842 = vmatprep.subr.bf16.mxu0 0
      %843 = vmatpush1.bf16.msra.mxu0 %v785
      %844 = vmatprep.subr.bf16.mxu0 0
      %845 = vmatpush1.bf16.msra.mxu0 %v784
      %846 = vmatprep.subr.bf16.mxu0 0
      %847 = vmatpush1.bf16.msra.mxu0 %v783
      %848 = vmatprep.subr.bf16.mxu0 0
      %849 = vmatpush1.bf16.msra.mxu0 %v782
      %850 = vmatprep.subr.bf16.mxu0 0
      %851 = vmatpush1.bf16.msra.mxu0 %v781
      %852 = vmatprep.subr.bf16.mxu0 0
      %853 = vmatpush1.bf16.msra.mxu0 %v780
      %854 = vmatprep.subr.bf16.mxu0 0
      %855 = vmatpush1.bf16.msra.mxu0 %v779
      %856 = vmatprep.subr.bf16.mxu0 0
      %857 = vmatpush1.bf16.msra.mxu0 %v778
      %858 = vmatprep.subr.bf16.mxu0 0
      %859 = vmatpush2.bf16.msra.mxu0 %v793
      %860 = vmatprep.subr.bf16.mxu0 0
      %861 = vmatpush2.bf16.msra.mxu0 %v792
      %862 = vmatprep.subr.bf16.mxu0 0
      %863 = vmatpush2.bf16.msra.mxu0 %v791
      %864 = vmatprep.subr.bf16.mxu0 0
      %865 = vmatpush2.bf16.msra.mxu0 %v790
      %866 = vmatprep.subr.bf16.mxu0 0
      %867 = vmatpush2.bf16.msra.mxu0 %v789
      %868 = vmatprep.subr.bf16.mxu0 0
      %869 = vmatpush2.bf16.msra.mxu0 %v788
      %870 = vmatprep.subr.bf16.mxu0 0
      %871 = vmatpush2.bf16.msra.mxu0 %v787
      %872 = vmatprep.subr.bf16.mxu0 0
      %873 = vmatpush2.bf16.msra.mxu0 %v786
      %874 = vmatprep.mubr.bf16.mxu0 %v629
      %875 = vmatmul.mubr.bf16.gmra.mxu0 %v628
      %v876 = vpop.f32.mrf.mxu0
      %v877 = vadd.f32 %v648, %v876
      %v878 = vpop.f32.mrf.mxu0
      %v879 = vpop.f32.mrf.mxu0
      %v880 = vadd.f32 %v648, %v879
      %v881 = vpop.f32.mrf.mxu0
      %882 = vmatprep.mubr.bf16.mxu0 %v633
      %883 = vmatmul.mubr.bf16.gmra.mxu0 %v632
      %v884 = vpop.f32.mrf.mxu0
      %v885 = vadd.f32 %v648, %v884
      %v886 = vpop.f32.mrf.mxu0
      %v887 = vpop.f32.mrf.mxu0
      %v888 = vadd.f32 %v648, %v887
      %v889 = vpop.f32.mrf.mxu0
      %890 = vmatprep.mubr.bf16.mxu0 %v637
      %891 = vmatmul.mubr.bf16.gmra.mxu0 %v636
      %v892 = vpop.f32.mrf.mxu0
      %v893 = vadd.f32 %v648, %v892
      %v894 = vpop.f32.mrf.mxu0
      %v895 = vpop.f32.mrf.mxu0
      %v896 = vadd.f32 %v648, %v895
      %v897 = vpop.f32.mrf.mxu0
      %898 = vmatprep.mubr.bf16.mxu0 %v641
      %899 = vmatmul.mubr.bf16.gmra.mxu0 %v640
      %v900 = vpop.f32.mrf.mxu0
      %v901 = vadd.f32 %v648, %v900
      %v902 = vpop.f32.mrf.mxu0
      %v903 = vpop.f32.mrf.mxu0
      %v904 = vadd.f32 %v648, %v903
      %v905 = vpop.f32.mrf.mxu0
      %906 = vdwg.mxu0
      %907 = vmatprep.subr.bf16.mxu0 0
      %908 = vmatpush1.bf16.msra.mxu0 %v801
      %909 = vmatprep.subr.bf16.mxu0 0
      %910 = vmatpush1.bf16.msra.mxu0 %v800
      %911 = vmatprep.subr.bf16.mxu0 0
      %912 = vmatpush1.bf16.msra.mxu0 %v799
      %913 = vmatprep.subr.bf16.mxu0 0
      %914 = vmatpush1.bf16.msra.mxu0 %v798
      %915 = vmatprep.subr.bf16.mxu0 0
      %916 = vmatpush1.bf16.msra.mxu0 %v797
      %917 = vmatprep.subr.bf16.mxu0 0
      %918 = vmatpush1.bf16.msra.mxu0 %v796
      %919 = vmatprep.subr.bf16.mxu0 0
      %920 = vmatpush1.bf16.msra.mxu0 %v795
      %921 = vmatprep.subr.bf16.mxu0 0
      %922 = vmatpush1.bf16.msra.mxu0 %v794
      %923 = vmatprep.subr.bf16.mxu0 0
      %924 = vmatpush2.bf16.msra.mxu0 %v809
      %925 = vmatprep.subr.bf16.mxu0 0
      %926 = vmatpush2.bf16.msra.mxu0 %v808
      %927 = vmatprep.subr.bf16.mxu0 0
      %928 = vmatpush2.bf16.msra.mxu0 %v807
      %929 = vmatprep.subr.bf16.mxu0 0
      %930 = vmatpush2.bf16.msra.mxu0 %v806
      %931 = vmatprep.subr.bf16.mxu0 0
      %932 = vmatpush2.bf16.msra.mxu0 %v805
      %933 = vmatprep.subr.bf16.mxu0 0
      %934 = vmatpush2.bf16.msra.mxu0 %v804
      %935 = vmatprep.subr.bf16.mxu0 0
      %936 = vmatpush2.bf16.msra.mxu0 %v803
      %937 = vmatprep.subr.bf16.mxu0 0
      %938 = vmatpush2.bf16.msra.mxu0 %v802
      %939 = vmatprep.mubr.bf16.mxu0 %v631
      %940 = vmatmul.mubr.bf16.gmra.mxu0 %v630
      %v941 = vpop.f32.mrf.mxu0
      %v942 = vadd.f32 %v877, %v941
      %v943 = vpop.f32.mrf.mxu0
      %v944 = vpop.f32.mrf.mxu0
      %v945 = vadd.f32 %v880, %v944
      %v946 = vpop.f32.mrf.mxu0
      %947 = vmatprep.mubr.bf16.mxu0 %v635
      %948 = vmatmul.mubr.bf16.gmra.mxu0 %v634
      %v949 = vpop.f32.mrf.mxu0
      %v950 = vadd.f32 %v885, %v949
      %v951 = vpop.f32.mrf.mxu0
      %v952 = vpop.f32.mrf.mxu0
      %v953 = vadd.f32 %v888, %v952
      %v954 = vpop.f32.mrf.mxu0
      %955 = vmatprep.mubr.bf16.mxu0 %v639
      %956 = vmatmul.mubr.bf16.gmra.mxu0 %v638
      %v957 = vpop.f32.mrf.mxu0
      %v958 = vadd.f32 %v893, %v957
      %v959 = vpop.f32.mrf.mxu0
      %v960 = vpop.f32.mrf.mxu0
      %v961 = vadd.f32 %v896, %v960
      %v962 = vpop.f32.mrf.mxu0
      %963 = vmatprep.mubr.bf16.mxu0 %v643
      %964 = vmatmul.mubr.bf16.gmra.mxu0 %v642
      %v965 = vpop.f32.mrf.mxu0
      %v966 = vadd.f32 %v901, %v965
      %v967 = vpop.f32.mrf.mxu0
      %v968 = vpop.f32.mrf.mxu0
      %v969 = vadd.f32 %v904, %v968
      %v970 = vpop.f32.mrf.mxu0
      %971 = vdwg.mxu0
      %v972 = vmax.f32 %v942, 0.0
      %v973 = vmax.f32 %v945, 0.0
      %v974 = vmax.f32 %v950, 0.0
      %v975 = vmax.f32 %v953, 0.0
      %v976 = vmax.f32 %v958, 0.0
      %v977 = vmax.f32 %v961, 0.0
      %v978 = vmax.f32 %v966, 0.0
      %v979 = vmax.f32 %v969, 0.0
      %v980 = vlaneseq
      %v981 = vshrl.u32 %v980, 7
      %v982 = vstv %s258
      %vm983 = vcmp.lt.s32.totalorder %v981, %v982
      %v984 = vsel %vm983, 1, 0
      %vm985 = vcmp.eq.s32.totalorder %v984, 1
      %v986 = vsel %vm985, %v972, 0.0
      %v987 = vsel %vm985, %v973, 0.0
      %v988 = vsel %vm985, %v974, 0.0
      %v989 = vsel %vm985, %v975, 0.0
      %v990 = vsel %vm985, %v976, 0.0
      %v991 = vsel %vm985, %v977, 0.0
      %v992 = vsel %vm985, %v978, 0.0
      %v993 = vsel %vm985, %v979, 0.0
      %v994 = vrot.slane %v986, 4
      %v995 = vmax.f32 %v986, %v994
      %v996 = vrot.slane %v995, 2
      %v997 = vmax.f32 %v995, %v996
      %v998 = vrot.slane %v997, 1
      %v999 = vmax.f32 %v997, %v998
      %v1000 = vrot.slane %v987, 4
      %v1001 = vmax.f32 %v987, %v1000
      %v1002 = vrot.slane %v1001, 2
      %v1003 = vmax.f32 %v1001, %v1002
      %v1004 = vrot.slane %v1003, 1
      %v1005 = vmax.f32 %v1003, %v1004
      %v1006 = vrot.slane %v988, 4
      %v1007 = vmax.f32 %v988, %v1006
      %v1008 = vrot.slane %v1007, 2
      %v1009 = vmax.f32 %v1007, %v1008
      %v1010 = vrot.slane %v1009, 1
      %v1011 = vmax.f32 %v1009, %v1010
      %v1012 = vrot.slane %v989, 4
      %v1013 = vmax.f32 %v989, %v1012
      %v1014 = vrot.slane %v1013, 2
      %v1015 = vmax.f32 %v1013, %v1014
      %v1016 = vrot.slane %v1015, 1
      %v1017 = vmax.f32 %v1015, %v1016
      %v1018 = vrot.slane %v990, 4
      %v1019 = vmax.f32 %v990, %v1018
      %v1020 = vrot.slane %v1019, 2
      %v1021 = vmax.f32 %v1019, %v1020
      %v1022 = vrot.slane %v1021, 1
      %v1023 = vmax.f32 %v1021, %v1022
      %v1024 = vrot.slane %v991, 4
      %v1025 = vmax.f32 %v991, %v1024
      %v1026 = vrot.slane %v1025, 2
      %v1027 = vmax.f32 %v1025, %v1026
      %v1028 = vrot.slane %v1027, 1
      %v1029 = vmax.f32 %v1027, %v1028
      %v1030 = vrot.slane %v992, 4
      %v1031 = vmax.f32 %v992, %v1030
      %v1032 = vrot.slane %v1031, 2
      %v1033 = vmax.f32 %v1031, %v1032
      %v1034 = vrot.slane %v1033, 1
      %v1035 = vmax.f32 %v1033, %v1034
      %v1036 = vrot.slane %v993, 4
      %v1037 = vmax.f32 %v993, %v1036
      %v1038 = vrot.slane %v1037, 2
      %v1039 = vmax.f32 %v1037, %v1038
      %v1040 = vrot.slane %v1039, 1
      %v1041 = vmax.f32 %v1039, %v1040
      %v1042 = vmul.f32 %v999, 2.0
      %v1043 = vmul.f32 %v1005, 2.0
      %v1044 = vmul.f32 %v1011, 2.0
      %v1045 = vmul.f32 %v1017, 2.0
      %v1046 = vmul.f32 %v1023, 2.0
      %v1047 = vmul.f32 %v1029, 2.0
      %v1048 = vmul.f32 %v1035, 2.0
      %v1049 = vmul.f32 %v1041, 2.0
      %vm1058 = vcmask 1041409
      %v1059 = vsel %vm1058, %v1043, %v1042
      %vm1060 = vcmask 1042434
      %v1061 = vsel %vm1060, %v1044, %v1059
      %vm1062 = vcmask 1043459
      %v1063 = vsel %vm1062, %v1045, %v1061
      %vm1064 = vcmask 1044484
      %v1065 = vsel %vm1064, %v1046, %v1063
      %vm1066 = vcmask 1045509
      %v1067 = vsel %vm1066, %v1047, %v1065
      %vm1068 = vcmask 1046534
      %v1069 = vsel %vm1068, %v1048, %v1067
      %vm1070 = vcmask 1047559
      %v1071 = vsel %vm1070, %v1049, %v1069
      %1073 = vst [vmem:[%s256] sm:$0xff] %v1071
      %p1074 = scmp.lt.s32.totalorder %s26, 2
      %s1075 = scalar_select %p1074, %s26, 2
      %p1076 = scmp.lt.s32.totalorder %s27, 0
      %s1077 = scalar_select %p1076, %s27, 0
      %s1078 = sadd.s32 %s1077, %s1075
      %s1079 = smul.addr %s1078, 8
      %s1080 = scalar_lea.vmem %s5, %s1079
      // Predicated region
      $region37: #{pool_hidden_net_forward.1} parent=35 // pred_check
        %p1081 = pneg %p150
      $region38: #{pool_hidden_net_forward.1} parent=35 // pred_check_branch
        %1083 = sbr.rel (%p1081) target = $region40
      $region39: #{pool_hidden_net_forward.1} parent=35 // pred_region
        _
      $region40: #{pool_hidden_net_forward.1} parent=35 // pred_fallthru
        _
    $region36: #{pool_hidden_net_forward.1} parent=5 // pred_fallthru
      _
    %p1084 = scmp.le.s32.totalorder 2, %s17
    // Predicated region
    $region41: #{pool_hidden_net_forward.1} parent=5 // pred_check
      %p1085 = pneg %p1084
    $region42: #{pool_hidden_net_forward.1} parent=5 // pred_check_branch
      %1087 = sbr.rel (%p1085) target = $region44
    $region43: #{pool_hidden_net_forward.1} parent=5 // pred_region
      %s1088 = ssub.s32 %s17, 2
      // Predicated region
      $region45: #{pool_hidden_net_forward.1} parent=43 // pred_check
        %p1089 = pneg %p156
      $region46: #{pool_hidden_net_forward.1} parent=43 // pred_check_branch
        %1091 = sbr.rel (%p1089) target = $region48
      $region47: #{pool_hidden_net_forward.1} parent=43 // pred_region
        %p1092 = scmp.lt.s32.totalorder %s28, 2
        %s1093 = scalar_select %p1092, %s28, 2
        %p1094 = scmp.lt.s32.totalorder %s29, 0
        %s1095 = scalar_select %p1094, %s29, 0
        %s1096 = sadd.s32 %s1095, %s1093
        %s1097 = smul.addr %s1096, 8
        %s1098 = scalar_lea.vmem %s5, %s1097
      $region48: #{pool_hidden_net_forward.1} parent=43 // pred_fallthru
        _
    $region44: #{pool_hidden_net_forward.1} parent=5 // pred_fallthru
      _
  $region6: #{pool_hidden_net_forward.1} parent=0 // loop_footer
    %s21 = sadd.s32 1, %s17
  $region7: #{pool_hidden_net_forward.1} parent=0 // loop_footer_branch
    %16 = sbr.rel target = $region3
  $region8: #{pool_hidden_net_forward.1} parent=0 // loop_exit
    _

</llo_original>
